<compile_context>
chip_gen: v7x
topology: tpu7x:2x2x1
jax: 0.10.0
libtpu: 0.0.40
codegen_flags: <defaults>
</compile_context>

<pallas_src>
import jax
import jax.numpy as jnp
from jax import lax
from jax.experimental import pallas as pl
from jax.experimental.pallas import tpu as pltpu

PROJECTION_STEPS = 10
STEP_SIZE = 0.1
_LANES = 128
_TILE_BUDGET_BYTES = 2 * 1024 * 1024   # VMEM-streaming per-tile input budget
_REG_RESIDENT_BYTES = 160 * 1024       # ~40 vregs: carry can live in registers


# ----------------------------------------------------------------------------
# Pallas kernel: full projection loop (fused update + carried per-sample sum)
# ----------------------------------------------------------------------------
def _make_kernel(steps: int, step_size: float, inv_n: float, *,
                 lane_dense: bool, compute_dtype, unroll: bool,
                 hoist_consts: bool):
    coef_neg = float(1.0 - 4.0 * step_size)   # applied where x < 0
    coef_pos = float(1.0 - 2.0 * step_size)   # applied where x >= 0
    mean_coef = float(2.0 * step_size * inv_n)

    def row_sum(xp):
        # Per-sample sum, accumulated in f32.  Cheap reduction order: collapse
        # the sublane (R) axis with VALU adds first, then one small XLU lane
        # reduce over the remaining (TB, 1, 128) slab.
        # TODO(synk): optionally offload the lane reduce to the idle MXU via a
        # ones(128, 1) dot if the XLU ever becomes binding.
        if lane_dense:
            part = jnp.sum(xp, axis=-2, keepdims=True, dtype=jnp.float32)
            return jnp.sum(part, axis=-1, keepdims=True)               # (TB,1,1)
        return jnp.sum(xp, axis=-1, keepdims=True, dtype=jnp.float32)  # (TB,1)

    def kernel(x_ref, o_ref):
        cdt = compute_dtype
        xp0 = x_ref[...].astype(cdt)

        if steps == 0:
            o_ref[...] = xp0.astype(o_ref.dtype)
            return

        # Hoisted select operands (JAX does not CSE broadcast_in_dim; an
        # unrolled loop would otherwise re-splat them every step).
        if hoist_consts:
            cn = jnp.full(xp0.shape, coef_neg, cdt)
            cp = jnp.full(xp0.shape, coef_pos, cdt)
        else:
            cn = jnp.asarray(coef_neg, dtype=cdt)
            cp = jnp.asarray(coef_pos, dtype=cdt)
        mc = jnp.float32(mean_coef)

        def update(xp, rs):
            # x - ss*grad  ==  where(x<0, 1-4ss, 1-2ss)*x - (2ss/N)*row_sum
            s = (rs * mc).astype(cdt)
            return jnp.where(xp < 0, cn, cp) * xp - s

        def body(_, carry):
            xp, rs = carry
            x_new = update(xp, rs)
            # Fuse the reduce needed by the *next* step into this sweep so the
            # carry is traversed once per step instead of twice.
            return x_new, row_sum(x_new)

        rs0 = row_sum(xp0)
        xp, rs = lax.fori_loop(0, steps - 1, body, (xp0, rs0), unroll=unroll)
        o_ref[...] = update(xp, rs).astype(o_ref.dtype)   # last step: no reduce

    return kernel


# ----------------------------------------------------------------------------
# Wrapper: layout selection, batch tiling, pallas_call
# ----------------------------------------------------------------------------
def constraint_projection(x_nchw: jax.Array,
                          steps: int = PROJECTION_STEPS,
                          step_size: float = STEP_SIZE) -> jax.Array:
    """Projects x (NCHW) onto the constraint manifold; returns same shape/dtype."""
    B, C, H, W = x_nchw.shape
    N = C * H * W

    # Optional bf16 element-wise path (v6e/v7x): only when the caller already
    # provides bf16; per-sample sums still accumulate in f32.
    compute_dtype = jnp.bfloat16 if x_nchw.dtype == jnp.bfloat16 else jnp.float32
    itemsize = max(jnp.dtype(compute_dtype).itemsize,
                   jnp.dtype(x_nchw.dtype).itemsize)
    per_sample_bytes = N * itemsize

    if N % _LANES == 0:
        # Lane-dense layout: each sample -> (R, 128) so small batches still
        # fill whole vregs; per-sample mean = reduce over last two axes.
        R = N // _LANES
        x_in = x_nchw.reshape(B, R, _LANES)
        lane_dense = True

        reg_tb = _REG_RESIDENT_BYTES // per_sample_bytes
        if reg_tb >= 1:
            TB = min(B, reg_tb)                       # register-resident path
        else:
            TB = min(B, max(1, _TILE_BUDGET_BYTES // per_sample_bytes))
        if B >= 2:
            TB = min(TB, pl.cdiv(B, 2))   # >=2 grid tiles: megacore + DMA overlap
        TB = max(1, TB)
        block = (TB, R, _LANES)
        index_map = lambda i: (i, 0, 0)
    else:
        # Fallback: flat (B, N) rows.  N is NOT lane-padded (padded zeros would
        # contaminate the per-sample sums after step 1).
        x_in = x_nchw.reshape(B, N)
        lane_dense = False
        vmem_tb = max(8, (_TILE_BUDGET_BYTES // per_sample_bytes) // 8 * 8)
        if B <= vmem_tb:
            TB = B                          # full-B block is a valid block shape
            if B % 8 == 0 and B >= 16:
                TB = max(8, (B // 2) // 8 * 8)   # >=2 tiles when cheap to do so
        else:
            TB = vmem_tb                    # multiple of 8
        block = (TB, N)
        index_map = lambda i: (i, 0)

    grid = (pl.cdiv(B, TB),)                # batch tiles are independent

    # Unroll only when the whole carry fits comfortably in vregs; large tiles
    # gain nothing from unrolling and would duplicate tile-sized temporaries.
    carry_bytes = TB * N * jnp.dtype(compute_dtype).itemsize
    unroll = carry_bytes <= _REG_RESIDENT_BYTES

    kernel = _make_kernel(steps, step_size, 1.0 / N,
                          lane_dense=lane_dense, compute_dtype=compute_dtype,
                          unroll=unroll, hoist_consts=unroll)

    out = pl.pallas_call(
        kernel,
        out_shape=jax.ShapeDtypeStruct(x_in.shape, x_nchw.dtype),
        grid_spec=pltpu.PrefetchScalarGridSpec(
            num_scalar_prefetch=0,
            grid=grid,
            in_specs=[pl.BlockSpec(block, index_map)],
            out_specs=pl.BlockSpec(block, index_map),
        ),
        input_output_aliases={0: 0},         # same shape/dtype: reuse HBM buffer
        compiler_params=pltpu.CompilerParams(
            dimension_semantics=("parallel",),   # shards across TCs on v7x
        ),
    )(x_in)

    return out.reshape(B, C, H, W)


# ----------------------------------------------------------------------------
# Pure-JAX reference mirroring the PyTorch module exactly (autograd loop)
# ----------------------------------------------------------------------------
def _c1(x):
    return x ** 2


def _c2(x):
    return jnp.maximum(-x, 0.0) ** 2


def _c3(x):
    m = jnp.mean(x, axis=(1, 2, 3), keepdims=True)
    return jnp.broadcast_to(m ** 2, x.shape)


_CONSTRAINTS = [_c1, _c2, _c3]


def reference_projection(x, steps=PROJECTION_STEPS, step_size=STEP_SIZE):
    def total_violation_sum(xp):
        violations = [fn(xp) for fn in _CONSTRAINTS]
        return jnp.stack(violations).sum(axis=0).sum()

    xp = x
    for _ in range(steps):
        grad = jax.grad(total_violation_sum)(xp)
        xp = xp - step_size * grad
    return xp


# ----------------------------------------------------------------------------
if __name__ == "__main__":
    key = jax.random.PRNGKey(0)
    x = jax.random.normal(key, (2, 4, 16, 16), dtype=jnp.float32)  # NCHW

    out = jax.block_until_ready(constraint_projection(x))
    ref = jax.block_until_ready(reference_projection(x))

    assert out.shape == x.shape and out.dtype == x.dtype
    assert jnp.allclose(out, ref, atol=1e-5, rtol=1e-5), (
        f"max abs err = {jnp.max(jnp.abs(out - ref))}")

    print("KERNEL_OK")
</pallas_src>

<mosaic_0001>
module attributes {stable_mosaic.version = 11 : i64} {
  func.func @kernel(%arg0: i32, %arg1: memref<1x8x128xf32, #tpu.memory_space<vmem>>, %arg2: memref<1x8x128xf32, #tpu.memory_space<vmem>>) attributes {dimension_semantics = [#tpu.dimension_semantics<parallel>], iteration_bounds = array<i64: 2>, scalar_prefetch = 0 : i64, scratch_operands = 0 : i64, tpu.core_type = #tpu.core_type<tc>, window_params = [{transform_indices = @transform_0, window_bounds = array<i64: 1, 8, 128>}, {transform_indices = @transform_1, window_bounds = array<i64: 1, 8, 128>}]} {
    %c0 = arith.constant 0 : index
    %c0_0 = arith.constant 0 : index
    %c0_1 = arith.constant 0 : index
    %0 = vector.load %arg1[%c0, %c0_0, %c0_1] : memref<1x8x128xf32, #tpu.memory_space<vmem>>, vector<1x8x128xf32>
    %cst = arith.constant 6.000000e-01 : f32
    %1 = vector.broadcast %cst : f32 to vector<1x8x128xf32>
    %cst_2 = arith.constant 8.000000e-01 : f32
    %2 = vector.broadcast %cst_2 : f32 to vector<1x8x128xf32>
    %cst_3 = arith.constant dense<0.000000e+00> : vector<1x128xf32>
    %3 = vector.multi_reduction <add>, %0, %cst_3 [1] : vector<1x8x128xf32> to vector<1x128xf32>
    %4 = vector.shape_cast %3 : vector<1x128xf32> to vector<1x1x128xf32>
    %cst_4 = arith.constant dense<0.000000e+00> : vector<1x1xf32>
    %5 = vector.multi_reduction <add>, %4, %cst_4 [2] : vector<1x1x128xf32> to vector<1x1xf32>
    %6 = vector.shape_cast %5 : vector<1x1xf32> to vector<1x1x1xf32>
    %cst_5 = arith.constant 1.95312503E-4 : f32
    %c0_i32 = arith.constant 0 : i32
    %7 = vector.broadcast %cst_5 : f32 to vector<1x1x1xf32>
    %8 = arith.mulf %6, %7 : vector<1x1x1xf32>
    %cst_6 = arith.constant 0.000000e+00 : f32
    %9 = vector.broadcast %cst_6 : f32 to vector<1x8x128xf32>
    %10 = arith.cmpf olt, %0, %9 : vector<1x8x128xf32>
    %11 = arith.select %10, %1, %2 : vector<1x8x128xi1>, vector<1x8x128xf32>
    %12 = arith.mulf %11, %0 : vector<1x8x128xf32>
    %13 = vector.broadcast %8 : vector<1x1x1xf32> to vector<1x8x128xf32>
    %14 = arith.subf %12, %13 : vector<1x8x128xf32>
    %cst_7 = arith.constant dense<0.000000e+00> : vector<1x128xf32>
    %15 = vector.multi_reduction <add>, %14, %cst_7 [1] : vector<1x8x128xf32> to vector<1x128xf32>
    %16 = vector.shape_cast %15 : vector<1x128xf32> to vector<1x1x128xf32>
    %cst_8 = arith.constant dense<0.000000e+00> : vector<1x1xf32>
    %17 = vector.multi_reduction <add>, %16, %cst_8 [2] : vector<1x1x128xf32> to vector<1x1xf32>
    %18 = vector.shape_cast %17 : vector<1x1xf32> to vector<1x1x1xf32>
    %c1_i32 = arith.constant 1 : i32
    %19 = vector.broadcast %cst_5 : f32 to vector<1x1x1xf32>
    %20 = arith.mulf %18, %19 : vector<1x1x1xf32>
    %cst_9 = arith.constant 0.000000e+00 : f32
    %21 = vector.broadcast %cst_9 : f32 to vector<1x8x128xf32>
    %22 = arith.cmpf olt, %14, %21 : vector<1x8x128xf32>
    %23 = arith.select %22, %1, %2 : vector<1x8x128xi1>, vector<1x8x128xf32>
    %24 = arith.mulf %23, %14 : vector<1x8x128xf32>
    %25 = vector.broadcast %20 : vector<1x1x1xf32> to vector<1x8x128xf32>
    %26 = arith.subf %24, %25 : vector<1x8x128xf32>
    %cst_10 = arith.constant dense<0.000000e+00> : vector<1x128xf32>
    %27 = vector.multi_reduction <add>, %26, %cst_10 [1] : vector<1x8x128xf32> to vector<1x128xf32>
    %28 = vector.shape_cast %27 : vector<1x128xf32> to vector<1x1x128xf32>
    %cst_11 = arith.constant dense<0.000000e+00> : vector<1x1xf32>
    %29 = vector.multi_reduction <add>, %28, %cst_11 [2] : vector<1x1x128xf32> to vector<1x1xf32>
    %30 = vector.shape_cast %29 : vector<1x1xf32> to vector<1x1x1xf32>
    %c2_i32 = arith.constant 2 : i32
    %31 = vector.broadcast %cst_5 : f32 to vector<1x1x1xf32>
    %32 = arith.mulf %30, %31 : vector<1x1x1xf32>
    %cst_12 = arith.constant 0.000000e+00 : f32
    %33 = vector.broadcast %cst_12 : f32 to vector<1x8x128xf32>
    %34 = arith.cmpf olt, %26, %33 : vector<1x8x128xf32>
    %35 = arith.select %34, %1, %2 : vector<1x8x128xi1>, vector<1x8x128xf32>
    %36 = arith.mulf %35, %26 : vector<1x8x128xf32>
    %37 = vector.broadcast %32 : vector<1x1x1xf32> to vector<1x8x128xf32>
    %38 = arith.subf %36, %37 : vector<1x8x128xf32>
    %cst_13 = arith.constant dense<0.000000e+00> : vector<1x128xf32>
    %39 = vector.multi_reduction <add>, %38, %cst_13 [1] : vector<1x8x128xf32> to vector<1x128xf32>
    %40 = vector.shape_cast %39 : vector<1x128xf32> to vector<1x1x128xf32>
    %cst_14 = arith.constant dense<0.000000e+00> : vector<1x1xf32>
    %41 = vector.multi_reduction <add>, %40, %cst_14 [2] : vector<1x1x128xf32> to vector<1x1xf32>
    %42 = vector.shape_cast %41 : vector<1x1xf32> to vector<1x1x1xf32>
    %c3_i32 = arith.constant 3 : i32
    %43 = vector.broadcast %cst_5 : f32 to vector<1x1x1xf32>
    %44 = arith.mulf %42, %43 : vector<1x1x1xf32>
    %cst_15 = arith.constant 0.000000e+00 : f32
    %45 = vector.broadcast %cst_15 : f32 to vector<1x8x128xf32>
    %46 = arith.cmpf olt, %38, %45 : vector<1x8x128xf32>
    %47 = arith.select %46, %1, %2 : vector<1x8x128xi1>, vector<1x8x128xf32>
    %48 = arith.mulf %47, %38 : vector<1x8x128xf32>
    %49 = vector.broadcast %44 : vector<1x1x1xf32> to vector<1x8x128xf32>
    %50 = arith.subf %48, %49 : vector<1x8x128xf32>
    %cst_16 = arith.constant dense<0.000000e+00> : vector<1x128xf32>
    %51 = vector.multi_reduction <add>, %50, %cst_16 [1] : vector<1x8x128xf32> to vector<1x128xf32>
    %52 = vector.shape_cast %51 : vector<1x128xf32> to vector<1x1x128xf32>
    %cst_17 = arith.constant dense<0.000000e+00> : vector<1x1xf32>
    %53 = vector.multi_reduction <add>, %52, %cst_17 [2] : vector<1x1x128xf32> to vector<1x1xf32>
    %54 = vector.shape_cast %53 : vector<1x1xf32> to vector<1x1x1xf32>
    %c4_i32 = arith.constant 4 : i32
    %55 = vector.broadcast %cst_5 : f32 to vector<1x1x1xf32>
    %56 = arith.mulf %54, %55 : vector<1x1x1xf32>
    %cst_18 = arith.constant 0.000000e+00 : f32
    %57 = vector.broadcast %cst_18 : f32 to vector<1x8x128xf32>
    %58 = arith.cmpf olt, %50, %57 : vector<1x8x128xf32>
    %59 = arith.select %58, %1, %2 : vector<1x8x128xi1>, vector<1x8x128xf32>
    %60 = arith.mulf %59, %50 : vector<1x8x128xf32>
    %61 = vector.broadcast %56 : vector<1x1x1xf32> to vector<1x8x128xf32>
    %62 = arith.subf %60, %61 : vector<1x8x128xf32>
    %cst_19 = arith.constant dense<0.000000e+00> : vector<1x128xf32>
    %63 = vector.multi_reduction <add>, %62, %cst_19 [1] : vector<1x8x128xf32> to vector<1x128xf32>
    %64 = vector.shape_cast %63 : vector<1x128xf32> to vector<1x1x128xf32>
    %cst_20 = arith.constant dense<0.000000e+00> : vector<1x1xf32>
    %65 = vector.multi_reduction <add>, %64, %cst_20 [2] : vector<1x1x128xf32> to vector<1x1xf32>
    %66 = vector.shape_cast %65 : vector<1x1xf32> to vector<1x1x1xf32>
    %c5_i32 = arith.constant 5 : i32
    %67 = vector.broadcast %cst_5 : f32 to vector<1x1x1xf32>
    %68 = arith.mulf %66, %67 : vector<1x1x1xf32>
    %cst_21 = arith.constant 0.000000e+00 : f32
    %69 = vector.broadcast %cst_21 : f32 to vector<1x8x128xf32>
    %70 = arith.cmpf olt, %62, %69 : vector<1x8x128xf32>
    %71 = arith.select %70, %1, %2 : vector<1x8x128xi1>, vector<1x8x128xf32>
    %72 = arith.mulf %71, %62 : vector<1x8x128xf32>
    %73 = vector.broadcast %68 : vector<1x1x1xf32> to vector<1x8x128xf32>
    %74 = arith.subf %72, %73 : vector<1x8x128xf32>
    %cst_22 = arith.constant dense<0.000000e+00> : vector<1x128xf32>
    %75 = vector.multi_reduction <add>, %74, %cst_22 [1] : vector<1x8x128xf32> to vector<1x128xf32>
    %76 = vector.shape_cast %75 : vector<1x128xf32> to vector<1x1x128xf32>
    %cst_23 = arith.constant dense<0.000000e+00> : vector<1x1xf32>
    %77 = vector.multi_reduction <add>, %76, %cst_23 [2] : vector<1x1x128xf32> to vector<1x1xf32>
    %78 = vector.shape_cast %77 : vector<1x1xf32> to vector<1x1x1xf32>
    %c6_i32 = arith.constant 6 : i32
    %79 = vector.broadcast %cst_5 : f32 to vector<1x1x1xf32>
    %80 = arith.mulf %78, %79 : vector<1x1x1xf32>
    %cst_24 = arith.constant 0.000000e+00 : f32
    %81 = vector.broadcast %cst_24 : f32 to vector<1x8x128xf32>
    %82 = arith.cmpf olt, %74, %81 : vector<1x8x128xf32>
    %83 = arith.select %82, %1, %2 : vector<1x8x128xi1>, vector<1x8x128xf32>
    %84 = arith.mulf %83, %74 : vector<1x8x128xf32>
    %85 = vector.broadcast %80 : vector<1x1x1xf32> to vector<1x8x128xf32>
    %86 = arith.subf %84, %85 : vector<1x8x128xf32>
    %cst_25 = arith.constant dense<0.000000e+00> : vector<1x128xf32>
    %87 = vector.multi_reduction <add>, %86, %cst_25 [1] : vector<1x8x128xf32> to vector<1x128xf32>
    %88 = vector.shape_cast %87 : vector<1x128xf32> to vector<1x1x128xf32>
    %cst_26 = arith.constant dense<0.000000e+00> : vector<1x1xf32>
    %89 = vector.multi_reduction <add>, %88, %cst_26 [2] : vector<1x1x128xf32> to vector<1x1xf32>
    %90 = vector.shape_cast %89 : vector<1x1xf32> to vector<1x1x1xf32>
    %c7_i32 = arith.constant 7 : i32
    %91 = vector.broadcast %cst_5 : f32 to vector<1x1x1xf32>
    %92 = arith.mulf %90, %91 : vector<1x1x1xf32>
    %cst_27 = arith.constant 0.000000e+00 : f32
    %93 = vector.broadcast %cst_27 : f32 to vector<1x8x128xf32>
    %94 = arith.cmpf olt, %86, %93 : vector<1x8x128xf32>
    %95 = arith.select %94, %1, %2 : vector<1x8x128xi1>, vector<1x8x128xf32>
    %96 = arith.mulf %95, %86 : vector<1x8x128xf32>
    %97 = vector.broadcast %92 : vector<1x1x1xf32> to vector<1x8x128xf32>
    %98 = arith.subf %96, %97 : vector<1x8x128xf32>
    %cst_28 = arith.constant dense<0.000000e+00> : vector<1x128xf32>
    %99 = vector.multi_reduction <add>, %98, %cst_28 [1] : vector<1x8x128xf32> to vector<1x128xf32>
    %100 = vector.shape_cast %99 : vector<1x128xf32> to vector<1x1x128xf32>
    %cst_29 = arith.constant dense<0.000000e+00> : vector<1x1xf32>
    %101 = vector.multi_reduction <add>, %100, %cst_29 [2] : vector<1x1x128xf32> to vector<1x1xf32>
    %102 = vector.shape_cast %101 : vector<1x1xf32> to vector<1x1x1xf32>
    %c8_i32 = arith.constant 8 : i32
    %103 = vector.broadcast %cst_5 : f32 to vector<1x1x1xf32>
    %104 = arith.mulf %102, %103 : vector<1x1x1xf32>
    %cst_30 = arith.constant 0.000000e+00 : f32
    %105 = vector.broadcast %cst_30 : f32 to vector<1x8x128xf32>
    %106 = arith.cmpf olt, %98, %105 : vector<1x8x128xf32>
    %107 = arith.select %106, %1, %2 : vector<1x8x128xi1>, vector<1x8x128xf32>
    %108 = arith.mulf %107, %98 : vector<1x8x128xf32>
    %109 = vector.broadcast %104 : vector<1x1x1xf32> to vector<1x8x128xf32>
    %110 = arith.subf %108, %109 : vector<1x8x128xf32>
    %cst_31 = arith.constant dense<0.000000e+00> : vector<1x128xf32>
    %111 = vector.multi_reduction <add>, %110, %cst_31 [1] : vector<1x8x128xf32> to vector<1x128xf32>
    %112 = vector.shape_cast %111 : vector<1x128xf32> to vector<1x1x128xf32>
    %cst_32 = arith.constant dense<0.000000e+00> : vector<1x1xf32>
    %113 = vector.multi_reduction <add>, %112, %cst_32 [2] : vector<1x1x128xf32> to vector<1x1xf32>
    %114 = vector.shape_cast %113 : vector<1x1xf32> to vector<1x1x1xf32>
    %cst_33 = arith.constant 1.95312503E-4 : f32
    %115 = vector.broadcast %cst_33 : f32 to vector<1x1x1xf32>
    %116 = arith.mulf %114, %115 : vector<1x1x1xf32>
    %cst_34 = arith.constant 0.000000e+00 : f32
    %117 = vector.broadcast %cst_34 : f32 to vector<1x8x128xf32>
    %118 = arith.cmpf olt, %110, %117 : vector<1x8x128xf32>
    %119 = arith.select %118, %1, %2 : vector<1x8x128xi1>, vector<1x8x128xf32>
    %120 = arith.mulf %119, %110 : vector<1x8x128xf32>
    %121 = vector.broadcast %116 : vector<1x1x1xf32> to vector<1x8x128xf32>
    %122 = arith.subf %120, %121 : vector<1x8x128xf32>
    %c0_35 = arith.constant 0 : index
    %c0_36 = arith.constant 0 : index
    %c0_37 = arith.constant 0 : index
    %123 = vector.load %arg2[%c0_35, %c0_36, %c0_37] : memref<1x8x128xf32, #tpu.memory_space<vmem>>, vector<1x8x128xf32>
    tpu.vector_store %arg2[%c0_35, %c0_36, %c0_37], %122 {strides = array<i32>} : memref<1x8x128xf32, #tpu.memory_space<vmem>>, vector<1x8x128xf32>,
    return
  }
  func.func @transform_0(%arg0: i32) -> (i32, i32, i32) {
    %c0_i32 = arith.constant 0 : i32
    %c0_i32_0 = arith.constant 0 : i32
    %c0_i32_1 = arith.constant 0 : i32
    return %arg0, %c0_i32, %c0_i32_0 : i32, i32, i32
  }
  func.func @transform_1(%arg0: i32) -> (i32, i32, i32) {
    %c0_i32 = arith.constant 0 : i32
    %c0_i32_0 = arith.constant 0 : i32
    %c0_i32_1 = arith.constant 0 : i32
    return %arg0, %c0_i32, %c0_i32_0 : i32, i32, i32
  }
}

</mosaic_0001>

<llo_original>
// kernel: tpu_custom_call.1
$region0: #{tpu_custom_call.1}
  #allocation0 [shape = 'u32[]', space=smem, size = 0x4, offset = 0x4, fixed_abs, tag = 'smem constant byte address 0x4 - core index']
  #allocation1 [shape = 'u32[144,128]{1,0:T(1,128)}', space=vmem, size = 0x12000, scoped, tag = 'internal scratch']
  %s0 = inlined_call_operand.hbm [shape: f32[2,8,128], index: 0, kind: input, shape index: {}, may-alias: {0,1}]
  %s1 = inlined_call_operand.hbm [shape: f32[2,8,128], index: 1, kind: output, shape index: {}, may-alias: {0,1}]
  %s2 = sld [smem:[#allocation0]]
  $region41: #{tpu_custom_call.1} parent=0
    _
  %s4 = ssub.s32 1, %s2
  %s5 = scalar_select 0, %s4, %s2
  $region1: #{tpu_custom_call.1} parent=0
    #allocation2 [shape = 'u8[8192]{0}', space=vmem, size = 0x2000, scoped, tag = 'input window, operand 0']
    #allocation3 [shape = 's32[2]{0}', space=sflag, size = 0x8, scoped, tag = 'scoped memory for tpu_custom_call.1']
    #allocation4 [shape = 's32[2]{0}', space=sflag, size = 0x8, scoped, tag = 'scoped memory for tpu_custom_call.1']
    #allocation5 [shape = 'u8[8192]{0}', space=vmem, size = 0x2000, scoped, tag = 'output window, operand 0']
    %6 = vsyncpa [#allocation3], 0
    %s7 = scalar_lea.sflag [#allocation3], 1
    %8 = vsyncpa %s7, 0
    %9 = vsyncpa [#allocation4], 0
    %s10 = scalar_lea.sflag [#allocation4], 1
    %11 = vsyncpa %s10, 0
    loop: start=0, step=1, limit=4
    $region2: #{tpu_custom_call.1} parent=1 // loop_pre_header
      _
    $region3: #{tpu_custom_call.1} parent=1 // loop_header
      %s13 = sphi 0, %s17
      %p14 = scmp.ge.s32.totalorder %s13, 4
      %s23 = sphi 0, %s25
      %s26 = sphi 0, %s23
      %s27 = sphi 0, %s26
      %s43 = sphi 0, %s27
      %s49 = sphi 0, %s51
      %s52 = sphi 0, %s49
      %s53 = sphi 0, %s52
      %s69 = sphi 0, %s53
    $region4: #{tpu_custom_call.1} parent=1 // loop_header_branch
      %16 = sbr.rel (%p14) target = $region8
    $region5: #{tpu_custom_call.1} parent=1 // loop_body
      %s18 = ssub.s32 %s13, 1
      %s19 = ssub.s32 %s13, 2
      %s20 = sadd.s32 %s13, 1
      %s21 = ssub.s32 %s13, %s20
      %p22 = scmp.eq.s32.totalorder %s21, 0
      %s24 = sadd.s32 %s23, 1
      %s25 = scalar_select %p22, %s23, %s24
      %p28 = pneg %p22
      %p29 = scmp.eq.s32.totalorder %s13, 1
      %p30 = por %p28, %p29
      %p31 = scmp.ne.s32.totalorder %s23, %s26
      %p32 = scmp.eq.s32.totalorder %s13, 0
      %p33 = por %p31, %p32
      %p34 = scmp.ne.s32.totalorder %s23, %s26
      %p35 = scmp.eq.s32.totalorder %s18, 1
      %p36 = por %p34, %p35
      %p37 = scmp.ne.s32.totalorder %s26, %s27
      %p38 = scmp.eq.s32.totalorder %s18, 0
      %p39 = por %p37, %p38
      %p40 = scmp.ne.s32.totalorder %s26, %s27
      %p41 = scmp.eq.s32.totalorder %s19, 1
      %p42 = por %p40, %p41
      %p44 = scmp.ne.s32.totalorder %s27, %s43
      %p45 = scmp.eq.s32.totalorder %s19, 0
      %p46 = por %p44, %p45
      %s47 = ssub.s32 %s13, %s20
      %p48 = scmp.eq.s32.totalorder %s47, 0
      %s50 = sadd.s32 %s49, 1
      %s51 = scalar_select %p48, %s49, %s50
      %p54 = pneg %p48
      %p55 = scmp.eq.s32.totalorder %s13, 1
      %p56 = por %p54, %p55
      %p57 = scmp.ne.s32.totalorder %s49, %s52
      %p58 = scmp.eq.s32.totalorder %s13, 0
      %p59 = por %p57, %p58
      %p60 = scmp.ne.s32.totalorder %s49, %s52
      %p61 = scmp.eq.s32.totalorder %s18, 1
      %p62 = por %p60, %p61
      %p63 = scmp.ne.s32.totalorder %s52, %s53
      %p64 = scmp.eq.s32.totalorder %s18, 0
      %p65 = por %p63, %p64
      %p66 = scmp.ne.s32.totalorder %s52, %s53
      %p67 = scmp.eq.s32.totalorder %s19, 1
      %p68 = por %p66, %p67
      %p70 = scmp.ne.s32.totalorder %s53, %s69
      %p71 = scmp.eq.s32.totalorder %s19, 0
      %p72 = por %p70, %p71
      %p73 = scmp.le.s32.totalorder 1, %s13
      %p74 = scmp.lt.s32.totalorder %s13, 3
      %p75 = pnand %p73, %p74
      %p76 = pneg %p75
      // Predicated region
      $region9: #{tpu_custom_call.1} parent=5 // pred_check
        _
      $region10: #{tpu_custom_call.1} parent=5 // pred_check_branch
        %78 = sbr.rel (%p75) target = $region12
      $region11: #{tpu_custom_call.1} parent=5 // pred_region
        %s79 = ssub.s32 %s13, 1
      $region12: #{tpu_custom_call.1} parent=5 // pred_fallthru
        _
      %p80 = scmp.lt.s32.totalorder %s13, 2
      // Predicated region
      $region13: #{tpu_custom_call.1} parent=5 // pred_check
        %p81 = pneg %p80
      $region14: #{tpu_custom_call.1} parent=5 // pred_check_branch
        %83 = sbr.rel (%p81) target = $region16
      $region15: #{tpu_custom_call.1} parent=5 // pred_region
        // Predicated region
        $region17: #{tpu_custom_call.1} parent=15 // pred_check
          %p84 = pneg %p33
        $region18: #{tpu_custom_call.1} parent=15 // pred_check_branch
          %86 = sbr.rel (%p84) target = $region20
        $region19: #{tpu_custom_call.1} parent=15 // pred_region
          %s87 = sand.u32 %s23, 1
          %s88 = scalar_lea.sflag [#allocation3], %s87
          %s89 = sand.u32 %s23, 1
          %s90 = smul.addr %s89, 8
          %s91 = scalar_lea.vmem [#allocation2], %s90
          %s93 = ssub.s32 128, 128
          %94 = vsyncadd %s88, %s93
          %s95 = smul.addr %s13, 128
          %s96 = scalar_lea.hbm %s0, %s95
          %s98 = sshll.u32 %s91, 4
          %s99 = int_to_ptr.vmem [resolvable:$true] %s98
          %101 = dma.hbm_to_vmem [thread:$0]  %s96, 128, %s99, %s88
        $region20: #{tpu_custom_call.1} parent=15 // pred_fallthru
          _
      $region16: #{tpu_custom_call.1} parent=5 // pred_fallthru
        _
      %p102 = scmp.le.s32.totalorder 1, %s13
      %p103 = scmp.lt.s32.totalorder %s13, 3
      %p104 = pnand %p102, %p103
      %p105 = pneg %p104
      // Predicated region
      $region21: #{tpu_custom_call.1} parent=5 // pred_check
        _
      $region22: #{tpu_custom_call.1} parent=5 // pred_check_branch
        %107 = sbr.rel (%p104) target = $region24
      $region23: #{tpu_custom_call.1} parent=5 // pred_region
        %s108 = ssub.s32 %s13, 1
        %s109 = sand.u32 %s26, 1
        %s110 = scalar_lea.sflag [#allocation3], %s109
        %s111 = sand.u32 %s26, 1
        %s112 = smul.addr %s111, 8
        %s113 = scalar_lea.vmem [#allocation2], %s112
        // Predicated region
        $region25: #{tpu_custom_call.1} parent=23 // pred_check
          %p114 = pneg %p39
        $region26: #{tpu_custom_call.1} parent=23 // pred_check_branch
          %116 = sbr.rel (%p114) target = $region28
        $region27: #{tpu_custom_call.1} parent=23 // pred_region
          %117 = dma.done %s110, 128
        $region28: #{tpu_custom_call.1} parent=23 // pred_fallthru
          _
        %s118 = sand.u32 %s26, 1
        %s119 = scalar_lea.sflag [#allocation3], %s118
        %s120 = sand.u32 %s26, 1
        %s121 = smul.addr %s120, 8
        %s122 = scalar_lea.vmem [#allocation2], %s121
        %p123 = pneg %p39
        %p124 = pneg %p36
        %p125 = pneg %p65
        %p126 = pneg %p62
        %s127 = sand.u32 %s52, 1
        %s128 = scalar_lea.sflag [#allocation4], %s127
        %s129 = sand.u32 %s52, 1
        %s130 = smul.addr %s129, 8
        %s131 = scalar_lea.vmem [#allocation5], %s130
        %v132 = vld [vmem:[%s113] sm:$0xff]
        %v133 = vrot.slane %v132, 4
        %v134 = vadd.f32 %v132, %v133
        %v135 = vrot.slane %v134, 2
        %v136 = vadd.f32 %v134, %v135
        %v137 = vrot.slane %v136, 1
        %v138 = vadd.f32 %v136, %v137
        %139 = vadd.xlane.f32.xlu0 %v138
        %v140 = vpop.xlane.xlu0 %139
        %v141 = vmul.f32 %v140, 0.0001953125
        %vm142 = vcmp.lt.f32.partialorder %v132, 0.0
        %v143 = vsel %vm142, 0.6, 0.8
        %v144 = vmul.f32 %v143, %v132
        %v145 = vsub.f32 %v144, %v141
        %v146 = vrot.slane %v145, 4
        %v147 = vadd.f32 %v145, %v146
        %v148 = vrot.slane %v147, 2
        %v149 = vadd.f32 %v147, %v148
        %v150 = vrot.slane %v149, 1
        %v151 = vadd.f32 %v149, %v150
        %152 = vadd.xlane.f32.xlu0 %v151
        %v153 = vpop.xlane.xlu0 %152
        %v154 = vmul.f32 %v153, 0.0001953125
        %vm155 = vcmp.lt.f32.partialorder %v145, 0.0
        %v156 = vsel %vm155, 0.6, 0.8
        %v157 = vmul.f32 %v156, %v145
        %v158 = vsub.f32 %v157, %v154
        %v159 = vrot.slane %v158, 4
        %v160 = vadd.f32 %v158, %v159
        %v161 = vrot.slane %v160, 2
        %v162 = vadd.f32 %v160, %v161
        %v163 = vrot.slane %v162, 1
        %v164 = vadd.f32 %v162, %v163
        %165 = vadd.xlane.f32.xlu0 %v164
        %v166 = vpop.xlane.xlu0 %165
        %v167 = vmul.f32 %v166, 0.0001953125
        %vm168 = vcmp.lt.f32.partialorder %v158, 0.0
        %v169 = vsel %vm168, 0.6, 0.8
        %v170 = vmul.f32 %v169, %v158
        %v171 = vsub.f32 %v170, %v167
        %v172 = vrot.slane %v171, 4
        %v173 = vadd.f32 %v171, %v172
        %v174 = vrot.slane %v173, 2
        %v175 = vadd.f32 %v173, %v174
        %v176 = vrot.slane %v175, 1
        %v177 = vadd.f32 %v175, %v176
        %178 = vadd.xlane.f32.xlu0 %v177
        %v179 = vpop.xlane.xlu0 %178
        %v180 = vmul.f32 %v179, 0.0001953125
        %vm181 = vcmp.lt.f32.partialorder %v171, 0.0
        %v182 = vsel %vm181, 0.6, 0.8
        %v183 = vmul.f32 %v182, %v171
        %v184 = vsub.f32 %v183, %v180
        %v185 = vrot.slane %v184, 4
        %v186 = vadd.f32 %v184, %v185
        %v187 = vrot.slane %v186, 2
        %v188 = vadd.f32 %v186, %v187
        %v189 = vrot.slane %v188, 1
        %v190 = vadd.f32 %v188, %v189
        %191 = vadd.xlane.f32.xlu0 %v190
        %v192 = vpop.xlane.xlu0 %191
        %v193 = vmul.f32 %v192, 0.0001953125
        %vm194 = vcmp.lt.f32.partialorder %v184, 0.0
        %v195 = vsel %vm194, 0.6, 0.8
        %v196 = vmul.f32 %v195, %v184
        %v197 = vsub.f32 %v196, %v193
        %v198 = vrot.slane %v197, 4
        %v199 = vadd.f32 %v197, %v198
        %v200 = vrot.slane %v199, 2
        %v201 = vadd.f32 %v199, %v200
        %v202 = vrot.slane %v201, 1
        %v203 = vadd.f32 %v201, %v202
        %204 = vadd.xlane.f32.xlu0 %v203
        %v205 = vpop.xlane.xlu0 %204
        %v206 = vmul.f32 %v205, 0.0001953125
        %vm207 = vcmp.lt.f32.partialorder %v197, 0.0
        %v208 = vsel %vm207, 0.6, 0.8
        %v209 = vmul.f32 %v208, %v197
        %v210 = vsub.f32 %v209, %v206
        %v211 = vrot.slane %v210, 4
        %v212 = vadd.f32 %v210, %v211
        %v213 = vrot.slane %v212, 2
        %v214 = vadd.f32 %v212, %v213
        %v215 = vrot.slane %v214, 1
        %v216 = vadd.f32 %v214, %v215
        %217 = vadd.xlane.f32.xlu0 %v216
        %v218 = vpop.xlane.xlu0 %217
        %v219 = vmul.f32 %v218, 0.0001953125
        %vm220 = vcmp.lt.f32.partialorder %v210, 0.0
        %v221 = vsel %vm220, 0.6, 0.8
        %v222 = vmul.f32 %v221, %v210
        %v223 = vsub.f32 %v222, %v219
        %v224 = vrot.slane %v223, 4
        %v225 = vadd.f32 %v223, %v224
        %v226 = vrot.slane %v225, 2
        %v227 = vadd.f32 %v225, %v226
        %v228 = vrot.slane %v227, 1
        %v229 = vadd.f32 %v227, %v228
        %230 = vadd.xlane.f32.xlu0 %v229
        %v231 = vpop.xlane.xlu0 %230
        %v232 = vmul.f32 %v231, 0.0001953125
        %vm233 = vcmp.lt.f32.partialorder %v223, 0.0
        %v234 = vsel %vm233, 0.6, 0.8
        %v235 = vmul.f32 %v234, %v223
        %v236 = vsub.f32 %v235, %v232
        %v237 = vrot.slane %v236, 4
        %v238 = vadd.f32 %v236, %v237
        %v239 = vrot.slane %v238, 2
        %v240 = vadd.f32 %v238, %v239
        %v241 = vrot.slane %v240, 1
        %v242 = vadd.f32 %v240, %v241
        %243 = vadd.xlane.f32.xlu0 %v242
        %v244 = vpop.xlane.xlu0 %243
        %v245 = vmul.f32 %v244, 0.0001953125
        %vm246 = vcmp.lt.f32.partialorder %v236, 0.0
        %v247 = vsel %vm246, 0.6, 0.8
        %v248 = vmul.f32 %v247, %v236
        %v249 = vsub.f32 %v248, %v245
        %v250 = vrot.slane %v249, 4
        %v251 = vadd.f32 %v249, %v250
        %v252 = vrot.slane %v251, 2
        %v253 = vadd.f32 %v251, %v252
        %v254 = vrot.slane %v253, 1
        %v255 = vadd.f32 %v253, %v254
        %256 = vadd.xlane.f32.xlu0 %v255
        %v257 = vpop.xlane.xlu0 %256
        %v258 = vmul.f32 %v257, 0.0001953125
        %vm259 = vcmp.lt.f32.partialorder %v249, 0.0
        %v260 = vsel %vm259, 0.6, 0.8
        %v261 = vmul.f32 %v260, %v249
        %v262 = vsub.f32 %v261, %v258
        %263 = vst [vmem:[%s131] sm:$0xff] %v262
        %s264 = sand.u32 %s52, 1
        %s265 = scalar_lea.sflag [#allocation4], %s264
        %s266 = sand.u32 %s52, 1
        %s267 = smul.addr %s266, 8
        %s268 = scalar_lea.vmem [#allocation5], %s267
        // Predicated region
        $region29: #{tpu_custom_call.1} parent=23 // pred_check
          %p269 = pneg %p62
        $region30: #{tpu_custom_call.1} parent=23 // pred_check_branch
          %271 = sbr.rel (%p269) target = $region32
        $region31: #{tpu_custom_call.1} parent=23 // pred_region
          %s273 = ssub.s32 128, 128
          %274 = vsyncadd %s265, %s273
          %s275 = smul.addr %s18, 128
          %s276 = scalar_lea.hbm %s1, %s275
          %s278 = sshll.u32 %s268, 4
          %s279 = int_to_ptr.vmem [resolvable:$true] %s278
          %281 = dma.vmem_to_hbm [thread:$0]  %s279, 128, %s276, %s265
        $region32: #{tpu_custom_call.1} parent=23 // pred_fallthru
          _
      $region24: #{tpu_custom_call.1} parent=5 // pred_fallthru
        _
      %p282 = scmp.le.s32.totalorder 2, %s13
      // Predicated region
      $region33: #{tpu_custom_call.1} parent=5 // pred_check
        %p283 = pneg %p282
      $region34: #{tpu_custom_call.1} parent=5 // pred_check_branch
        %285 = sbr.rel (%p283) target = $region36
      $region35: #{tpu_custom_call.1} parent=5 // pred_region
        %s286 = ssub.s32 %s13, 2
        // Predicated region
        $region37: #{tpu_custom_call.1} parent=35 // pred_check
          %p287 = pneg %p68
        $region38: #{tpu_custom_call.1} parent=35 // pred_check_branch
          %289 = sbr.rel (%p287) target = $region40
        $region39: #{tpu_custom_call.1} parent=35 // pred_region
          %s290 = sand.u32 %s53, 1
          %s291 = scalar_lea.sflag [#allocation4], %s290
          %s292 = sand.u32 %s53, 1
          %s293 = smul.addr %s292, 8
          %s294 = scalar_lea.vmem [#allocation5], %s293
          %295 = dma.done %s291, 128
        $region40: #{tpu_custom_call.1} parent=35 // pred_fallthru
          _
      $region36: #{tpu_custom_call.1} parent=5 // pred_fallthru
        _
    $region6: #{tpu_custom_call.1} parent=1 // loop_footer
      %s17 = sadd.s32 1, %s13
    $region7: #{tpu_custom_call.1} parent=1 // loop_footer_branch
      %12 = sbr.rel target = $region3
    $region8: #{tpu_custom_call.1} parent=1 // loop_exit
      _
    %296 = vsyncpa [#allocation3], 1
    %s297 = scalar_lea.sflag [#allocation3], 1
    %298 = vsyncpa %s297, 1
    %299 = vsyncpa [#allocation4], 1
    %s300 = scalar_lea.sflag [#allocation4], 1
    %301 = vsyncpa %s300, 1

</llo_original>
